<compile_context>
chip_gen: v7x
topology: tpu7x:2x2x1
jax: 0.10.0
libtpu: 0.0.40
codegen_flags: <defaults>
</compile_context>

<pallas_src>
import jax
import jax.numpy as jnp
from jax import lax
from jax.experimental import pallas as pl
from jax.experimental.pallas import tpu as pltpu


def bilstm_kernel(x_ref, wih_ref, whh_ref, b_ref, out_ref, hn_ref, cn_ref):
    """Fused bidirectional single-layer LSTM.

    x_ref:   (T*Bp, 2E) time-major rows; cols [0:E] = x(t), cols [E:2E] = x(T-1-t)
    wih_ref: (2E, 8H)   block-structured, gate-permuted input weights
                        (forward gate cols read rows 0:E, backward gate cols rows E:2E)
    whh_ref: (2H, 8H)   block-diagonal hidden weights (rows = [h_f | h_b])
    b_ref:   (1, 8H)    fused biases (b_ih + b_hh), same column order
    out_ref: (Bp, T*2H) per-time blocks [h_f(t) | h_b(t)], lane-dense single store
    hn_ref:  (Bp, 2H)   concat(h_fwd_final, h_bwd_final)
    cn_ref:  (Bp, 2H)   concat(c_fwd_final, c_bwd_final)
    """
    Bp = out_ref.shape[0]
    H = b_ref.shape[1] // 8
    T = out_ref.shape[1] // (2 * H)

    # One big input projection for every step & both directions (off the recurrent
    # critical path; pipelines on the MXU). Biases folded in.
    xproj = (jnp.dot(x_ref[...], wih_ref[...], preferred_element_type=jnp.float32)
             + b_ref[...])                                     # (T*Bp, 8H)
    whh = whh_ref[...]                                         # (2H, 8H)

    h_cat = jnp.zeros((Bp, 2 * H), jnp.float32)                # [h_f | h_b]
    c_cat = jnp.zeros((Bp, 2 * H), jnp.float32)                # [c_f | c_b]

    hf = [None] * T                                            # per-time forward hiddens
    hb = [None] * T                                            # per-time backward hiddens

    # Fully unrolled fused recurrence: step s advances the forward cell at time s and
    # the backward cell at time T-1-s (independent chains interleave). Per step the
    # critical path is one (Bp, 2H) @ (2H, 8H) matmul + fused gate math.
    for s in range(T):
        xg = xproj[s * Bp:(s + 1) * Bp, :]                     # contiguous, sublane-aligned
        gates = xg + jnp.dot(h_cat, whh, preferred_element_type=jnp.float32)
        sg = jax.nn.sigmoid(gates[:, 0:6 * H])                 # i_f,i_b,f_f,f_b,o_f,o_b
        i_cat = sg[:, 0:2 * H]
        f_cat = sg[:, 2 * H:4 * H]
        o_cat = sg[:, 4 * H:6 * H]
        g_cat = jnp.tanh(gates[:, 6 * H:8 * H])                # g_f, g_b
        c_cat = f_cat * c_cat + i_cat * g_cat
        h_cat = o_cat * jnp.tanh(c_cat)
        hf[s] = h_cat[:, 0:H]
        hb[T - 1 - s] = h_cat[:, H:2 * H]

    # One lane-dense store, already in the (B, T, 2H) layout the module contract wants.
    out_ref[...] = jnp.concatenate(
        [blk for t in range(T) for blk in (hf[t], hb[t])], axis=1)
    hn_ref[...] = h_cat
    cn_ref[...] = c_cat


def make_params(key, vocab_size, emb_size, hidden_size, pad_idx=0):
    """Deterministic PyTorch-style init + fused/permuted kernel weights."""
    H = hidden_size
    E = emb_size
    ks = jax.random.split(key, 9)
    emb = jax.random.normal(ks[0], (vocab_size, E), jnp.float32)
    emb = emb.at[pad_idx].set(0.0)                             # padding_idx row is zero

    k = 1.0 / jnp.sqrt(jnp.float32(H))

    def u(kk, shape):
        return jax.random.uniform(kk, shape, jnp.float32, minval=-k, maxval=k)

    params = {"embedding": emb}
    for i, d in enumerate(("f", "b")):
        w_ih = u(ks[1 + 4 * i], (4 * H, E))
        w_hh = u(ks[2 + 4 * i], (4 * H, H))
        b_ih = u(ks[3 + 4 * i], (4 * H,))
        b_hh = u(ks[4 + 4 * i], (4 * H,))
        params[f"wih_{d}"] = w_ih.T                            # (E, 4H) cols i|f|g|o
        params[f"whh_{d}"] = w_hh.T                            # (H, 4H)
        params[f"b_{d}"] = (b_ih + b_hh).reshape(1, 4 * H)     # (1, 4H)

    def split4(w):  # (X, 4H) -> i, f, g, o blocks each (X, H)
        return w[:, 0:H], w[:, H:2 * H], w[:, 2 * H:3 * H], w[:, 3 * H:4 * H]

    # Gate-permuted column blocks (H wide each): [i_f, i_b, f_f, f_b, o_f, o_b, g_f, g_b].
    i_f, f_f, g_f, o_f = split4(params["wih_f"])
    i_b, f_b, g_b, o_b = split4(params["wih_b"])
    ZE = jnp.zeros((E, H), jnp.float32)
    top_e = lambda m: jnp.concatenate([m, ZE], axis=0)         # reads forward input rows
    bot_e = lambda m: jnp.concatenate([ZE, m], axis=0)         # reads backward input rows
    params["wih_cat"] = jnp.concatenate(
        [top_e(i_f), bot_e(i_b), top_e(f_f), bot_e(f_b),
         top_e(o_f), bot_e(o_b), top_e(g_f), bot_e(g_b)], axis=1)  # (2E, 8H)

    hi_f, hf_f, hg_f, ho_f = split4(params["whh_f"])
    hi_b, hf_b, hg_b, ho_b = split4(params["whh_b"])
    ZH = jnp.zeros((H, H), jnp.float32)
    top_h = lambda m: jnp.concatenate([m, ZH], axis=0)         # acts on h_f rows
    bot_h = lambda m: jnp.concatenate([ZH, m], axis=0)         # acts on h_b rows
    params["whh_bd"] = jnp.concatenate(
        [top_h(hi_f), bot_h(hi_b), top_h(hf_f), bot_h(hf_b),
         top_h(ho_f), bot_h(ho_b), top_h(hg_f), bot_h(hg_b)], axis=1)  # (2H, 8H)

    bi_f, bf_f, bg_f, bo_f = split4(params["b_f"])
    bi_b, bf_b, bg_b, bo_b = split4(params["b_b"])
    params["b_cat"] = jnp.concatenate(
        [bi_f, bi_b, bf_f, bf_b, bo_f, bo_b, bg_f, bg_b], axis=1)  # (1, 8H)
    return params


def sequence_encoder_forward(input_src, params):
    """input_src: int32 (B, T). Returns (output (B,T,2H), (hn (B,2H), cn (B,2H)))."""
    B, T = input_src.shape
    H = params["whh_f"].shape[0]
    E = params["embedding"].shape[1]

    # Pad batch to a sublane multiple so every per-step slice is vreg-aligned and all
    # 8 sublanes carry live data; padded rows are sliced off after the call.
    Bp = max(8, ((B + 7) // 8) * 8)
    pad = Bp - B
    tokens = input_src
    if pad:
        tokens = jnp.concatenate(
            [tokens, jnp.zeros((pad, T), tokens.dtype)], axis=0)   # pad_idx rows

    # Embedding lookup emits time-major directly; backward stream is time-reversed at
    # gather time (free) and feature-concatenated so the kernel needs no per-step select.
    # Dropout = identity (eval mode).
    emb = params["embedding"]
    x_f = emb[tokens.T]                                        # (T, Bp, E)
    x_b = x_f[::-1]                                            # (T, Bp, E) time-reversed
    x_cat2d = jnp.concatenate([x_f, x_b], axis=-1).reshape(T * Bp, 2 * E)

    vmem = pl.BlockSpec(memory_space=pltpu.MemorySpace.VMEM)
    out_shapes = (
        jax.ShapeDtypeStruct((Bp, T * 2 * H), jnp.float32),    # per-time [h_f | h_b] blocks
        jax.ShapeDtypeStruct((Bp, 2 * H), jnp.float32),        # hn_output
        jax.ShapeDtypeStruct((Bp, 2 * H), jnp.float32),        # cn_output
    )
    cost = pl.CostEstimate(
        flops=2 * (T * Bp) * (2 * E) * (8 * H) + T * 2 * Bp * (2 * H) * (8 * H),
        transcendentals=T * Bp * 10 * H,
        bytes_accessed=4 * (T * Bp * 2 * E + 2 * E * 8 * H + 2 * H * 8 * H + 8 * H
                            + Bp * T * 2 * H + 2 * Bp * 2 * H),
    )

    out_full, hn_full, cn_full = pl.pallas_call(
        bilstm_kernel,
        out_shape=out_shapes,
        in_specs=[vmem] * 4,
        out_specs=(vmem, vmem, vmem),
        compiler_params=pltpu.CompilerParams(vmem_limit_bytes=32 * 1024 * 1024),
        cost_estimate=cost,
    )(x_cat2d, params["wih_cat"], params["whh_bd"], params["b_cat"])

    output = out_full[:B].reshape(B, T, 2 * H)                 # free reshape, batch_first
    return output, (hn_full[:B], cn_full[:B])


def _reference_forward(input_src, params):
    """Pure-JAX reference (standard per-direction formulation, i|f|g|o order)."""
    src_emb = params["embedding"][input_src]                   # (B, T, E)
    x = jnp.transpose(src_emb, (1, 0, 2))                      # (T, B, E)
    T, B, _ = x.shape
    H = params["whh_f"].shape[0]

    def run_dir(xs, wih, whh, b):
        def step(carry, x_t):
            h, c = carry
            gates = x_t @ wih + h @ whh + b
            i = jax.nn.sigmoid(gates[:, 0 * H:1 * H])
            f = jax.nn.sigmoid(gates[:, 1 * H:2 * H])
            g = jnp.tanh(gates[:, 2 * H:3 * H])
            o = jax.nn.sigmoid(gates[:, 3 * H:4 * H])
            c = f * c + i * g
            h = o * jnp.tanh(c)
            return (h, c), h
        init = (jnp.zeros((B, H), jnp.float32), jnp.zeros((B, H), jnp.float32))
        (h_last, c_last), hs = lax.scan(step, init, xs)
        return hs, h_last, c_last

    hs_f, hF, cF = run_dir(x, params["wih_f"], params["whh_f"], params["b_f"])
    hs_b, hB, cB = run_dir(x[::-1], params["wih_b"], params["whh_b"], params["b_b"])
    out = jnp.concatenate([hs_f, hs_b[::-1]], axis=-1)         # (T, B, 2H)
    return (jnp.transpose(out, (1, 0, 2)),
            (jnp.concatenate([hF, hB], axis=-1), jnp.concatenate([cF, cB], axis=-1)))


if __name__ == "__main__":
    VOCAB = 50          # input_size
    EMB = 32            # enc_emb_size
    HID = 32            # enc_hidden_size
    B, T = 2, 8

    key = jax.random.PRNGKey(0)
    k_par, k_tok = jax.random.split(key)
    params = make_params(k_par, VOCAB, EMB, HID, pad_idx=0)

    tokens = jax.random.randint(k_tok, (B, T), 1, VOCAB, dtype=jnp.int32)
    tokens = tokens.at[:, -2:].set(0)   # trailing pad tokens

    fwd = jax.jit(sequence_encoder_forward)
    output, (hn_output, cn_output) = fwd(tokens, params)
    jax.block_until_ready((output, hn_output, cn_output))

    # Sanity check against pure-JAX reference.
    ref_out, (ref_hn, ref_cn) = _reference_forward(tokens, params)
    assert output.shape == (B, T, 2 * HID)
    assert hn_output.shape == (B, 2 * HID) and cn_output.shape == (B, 2 * HID)
    assert jnp.allclose(output, ref_out, atol=1e-4, rtol=1e-4)
    assert jnp.allclose(hn_output, ref_hn, atol=1e-4, rtol=1e-4)
    assert jnp.allclose(cn_output, ref_cn, atol=1e-4, rtol=1e-4)

    print("KERNEL_OK")
</pallas_src>

<mosaic_0001>
module attributes {stable_mosaic.version = 11 : i64} {
  func.func @bilstm_kernel(%arg0: memref<64x64xf32, #tpu.memory_space<vmem>>, %arg1: memref<64x256xf32, #tpu.memory_space<vmem>>, %arg2: memref<64x256xf32, #tpu.memory_space<vmem>>, %arg3: memref<1x256xf32, #tpu.memory_space<vmem>>, %arg4: memref<8x512xf32, #tpu.memory_space<vmem>>, %arg5: memref<8x64xf32, #tpu.memory_space<vmem>>, %arg6: memref<8x64xf32, #tpu.memory_space<vmem>>) attributes {dimension_semantics = [], scalar_prefetch = 0 : i64, scratch_operands = 0 : i64, tpu.core_type = #tpu.core_type<tc>} {
    %c0 = arith.constant 0 : index
    %c0_0 = arith.constant 0 : index
    %0 = vector.load %arg0[%c0, %c0_0] : memref<64x64xf32, #tpu.memory_space<vmem>>, vector<64x64xf32>
    %c0_1 = arith.constant 0 : index
    %c0_2 = arith.constant 0 : index
    %1 = vector.load %arg1[%c0_1, %c0_2] : memref<64x256xf32, #tpu.memory_space<vmem>>, vector<64x256xf32>
    %cst = arith.constant dense<0.000000e+00> : vector<64x256xf32>
    %2 = tpu.matmul %0, %1, %cst {dimension_numbers = #tpu.dot_dimension_numbers<[1], [0], [0], [1], [0, 0, 1, 1], [], []>} : vector<64x64xf32>, vector<64x256xf32>, vector<64x256xf32> -> vector<64x256xf32>
    %c0_3 = arith.constant 0 : index
    %c0_4 = arith.constant 0 : index
    %3 = vector.load %arg3[%c0_3, %c0_4] : memref<1x256xf32, #tpu.memory_space<vmem>>, vector<1x256xf32>
    %4 = vector.broadcast %3 : vector<1x256xf32> to vector<64x256xf32>
    %5 = arith.addf %2, %4 : vector<64x256xf32>
    %c0_5 = arith.constant 0 : index
    %c0_6 = arith.constant 0 : index
    %6 = vector.load %arg2[%c0_5, %c0_6] : memref<64x256xf32, #tpu.memory_space<vmem>>, vector<64x256xf32>
    %cst_7 = arith.constant 0.000000e+00 : f32
    %7 = vector.broadcast %cst_7 : f32 to vector<8x64xf32>
    %cst_8 = arith.constant 0.000000e+00 : f32
    %8 = vector.broadcast %cst_8 : f32 to vector<8x64xf32>
    %9 = vector.extract_strided_slice %5 {offsets = [0, 0], sizes = [8, 256], strides = [1, 1]} : vector<64x256xf32> to vector<8x256xf32>
    %cst_9 = arith.constant dense<0.000000e+00> : vector<8x256xf32>
    %10 = tpu.matmul %7, %6, %cst_9 {dimension_numbers = #tpu.dot_dimension_numbers<[1], [0], [0], [1], [0, 0, 1, 1], [], []>} : vector<8x64xf32>, vector<64x256xf32>, vector<8x256xf32> -> vector<8x256xf32>
    %11 = arith.addf %9, %10 : vector<8x256xf32>
    %12 = vector.extract_strided_slice %11 {offsets = [0, 0], sizes = [8, 192], strides = [1, 1]} : vector<8x256xf32> to vector<8x192xf32>
    %13 = arith.negf %12 : vector<8x192xf32>
    %14 = math.exp %13 : vector<8x192xf32>
    %cst_10 = arith.constant 1.000000e+00 : f32
    %15 = vector.broadcast %cst_10 : f32 to vector<8x192xf32>
    %16 = arith.addf %15, %14 : vector<8x192xf32>
    %17 = arith.divf %15, %16 : vector<8x192xf32>
    %18 = vector.extract_strided_slice %17 {offsets = [0, 0], sizes = [8, 64], strides = [1, 1]} : vector<8x192xf32> to vector<8x64xf32>
    %19 = vector.extract_strided_slice %17 {offsets = [0, 64], sizes = [8, 64], strides = [1, 1]} : vector<8x192xf32> to vector<8x64xf32>
    %20 = vector.extract_strided_slice %17 {offsets = [0, 128], sizes = [8, 64], strides = [1, 1]} : vector<8x192xf32> to vector<8x64xf32>
    %21 = vector.extract_strided_slice %11 {offsets = [0, 192], sizes = [8, 64], strides = [1, 1]} : vector<8x256xf32> to vector<8x64xf32>
    %22 = math.tanh %21 : vector<8x64xf32>
    %23 = arith.mulf %19, %8 : vector<8x64xf32>
    %24 = arith.mulf %18, %22 : vector<8x64xf32>
    %25 = arith.addf %23, %24 : vector<8x64xf32>
    %26 = math.tanh %25 : vector<8x64xf32>
    %27 = arith.mulf %20, %26 : vector<8x64xf32>
    %28 = vector.extract_strided_slice %27 {offsets = [0, 0], sizes = [8, 32], strides = [1, 1]} : vector<8x64xf32> to vector<8x32xf32>
    %29 = vector.extract_strided_slice %27 {offsets = [0, 32], sizes = [8, 32], strides = [1, 1]} : vector<8x64xf32> to vector<8x32xf32>
    %30 = vector.extract_strided_slice %5 {offsets = [8, 0], sizes = [8, 256], strides = [1, 1]} : vector<64x256xf32> to vector<8x256xf32>
    %cst_11 = arith.constant dense<0.000000e+00> : vector<8x256xf32>
    %31 = tpu.matmul %27, %6, %cst_11 {dimension_numbers = #tpu.dot_dimension_numbers<[1], [0], [0], [1], [0, 0, 1, 1], [], []>} : vector<8x64xf32>, vector<64x256xf32>, vector<8x256xf32> -> vector<8x256xf32>
    %32 = arith.addf %30, %31 : vector<8x256xf32>
    %33 = vector.extract_strided_slice %32 {offsets = [0, 0], sizes = [8, 192], strides = [1, 1]} : vector<8x256xf32> to vector<8x192xf32>
    %34 = arith.negf %33 : vector<8x192xf32>
    %35 = math.exp %34 : vector<8x192xf32>
    %cst_12 = arith.constant 1.000000e+00 : f32
    %36 = vector.broadcast %cst_12 : f32 to vector<8x192xf32>
    %37 = arith.addf %36, %35 : vector<8x192xf32>
    %38 = arith.divf %36, %37 : vector<8x192xf32>
    %39 = vector.extract_strided_slice %38 {offsets = [0, 0], sizes = [8, 64], strides = [1, 1]} : vector<8x192xf32> to vector<8x64xf32>
    %40 = vector.extract_strided_slice %38 {offsets = [0, 64], sizes = [8, 64], strides = [1, 1]} : vector<8x192xf32> to vector<8x64xf32>
    %41 = vector.extract_strided_slice %38 {offsets = [0, 128], sizes = [8, 64], strides = [1, 1]} : vector<8x192xf32> to vector<8x64xf32>
    %42 = vector.extract_strided_slice %32 {offsets = [0, 192], sizes = [8, 64], strides = [1, 1]} : vector<8x256xf32> to vector<8x64xf32>
    %43 = math.tanh %42 : vector<8x64xf32>
    %44 = arith.mulf %40, %25 : vector<8x64xf32>
    %45 = arith.mulf %39, %43 : vector<8x64xf32>
    %46 = arith.addf %44, %45 : vector<8x64xf32>
    %47 = math.tanh %46 : vector<8x64xf32>
    %48 = arith.mulf %41, %47 : vector<8x64xf32>
    %49 = vector.extract_strided_slice %48 {offsets = [0, 0], sizes = [8, 32], strides = [1, 1]} : vector<8x64xf32> to vector<8x32xf32>
    %50 = vector.extract_strided_slice %48 {offsets = [0, 32], sizes = [8, 32], strides = [1, 1]} : vector<8x64xf32> to vector<8x32xf32>
    %51 = vector.extract_strided_slice %5 {offsets = [16, 0], sizes = [8, 256], strides = [1, 1]} : vector<64x256xf32> to vector<8x256xf32>
    %cst_13 = arith.constant dense<0.000000e+00> : vector<8x256xf32>
    %52 = tpu.matmul %48, %6, %cst_13 {dimension_numbers = #tpu.dot_dimension_numbers<[1], [0], [0], [1], [0, 0, 1, 1], [], []>} : vector<8x64xf32>, vector<64x256xf32>, vector<8x256xf32> -> vector<8x256xf32>
    %53 = arith.addf %51, %52 : vector<8x256xf32>
    %54 = vector.extract_strided_slice %53 {offsets = [0, 0], sizes = [8, 192], strides = [1, 1]} : vector<8x256xf32> to vector<8x192xf32>
    %55 = arith.negf %54 : vector<8x192xf32>
    %56 = math.exp %55 : vector<8x192xf32>
    %cst_14 = arith.constant 1.000000e+00 : f32
    %57 = vector.broadcast %cst_14 : f32 to vector<8x192xf32>
    %58 = arith.addf %57, %56 : vector<8x192xf32>
    %59 = arith.divf %57, %58 : vector<8x192xf32>
    %60 = vector.extract_strided_slice %59 {offsets = [0, 0], sizes = [8, 64], strides = [1, 1]} : vector<8x192xf32> to vector<8x64xf32>
    %61 = vector.extract_strided_slice %59 {offsets = [0, 64], sizes = [8, 64], strides = [1, 1]} : vector<8x192xf32> to vector<8x64xf32>
    %62 = vector.extract_strided_slice %59 {offsets = [0, 128], sizes = [8, 64], strides = [1, 1]} : vector<8x192xf32> to vector<8x64xf32>
    %63 = vector.extract_strided_slice %53 {offsets = [0, 192], sizes = [8, 64], strides = [1, 1]} : vector<8x256xf32> to vector<8x64xf32>
    %64 = math.tanh %63 : vector<8x64xf32>
    %65 = arith.mulf %61, %46 : vector<8x64xf32>
    %66 = arith.mulf %60, %64 : vector<8x64xf32>
    %67 = arith.addf %65, %66 : vector<8x64xf32>
    %68 = math.tanh %67 : vector<8x64xf32>
    %69 = arith.mulf %62, %68 : vector<8x64xf32>
    %70 = vector.extract_strided_slice %69 {offsets = [0, 0], sizes = [8, 32], strides = [1, 1]} : vector<8x64xf32> to vector<8x32xf32>
    %71 = vector.extract_strided_slice %69 {offsets = [0, 32], sizes = [8, 32], strides = [1, 1]} : vector<8x64xf32> to vector<8x32xf32>
    %72 = vector.extract_strided_slice %5 {offsets = [24, 0], sizes = [8, 256], strides = [1, 1]} : vector<64x256xf32> to vector<8x256xf32>
    %cst_15 = arith.constant dense<0.000000e+00> : vector<8x256xf32>
    %73 = tpu.matmul %69, %6, %cst_15 {dimension_numbers = #tpu.dot_dimension_numbers<[1], [0], [0], [1], [0, 0, 1, 1], [], []>} : vector<8x64xf32>, vector<64x256xf32>, vector<8x256xf32> -> vector<8x256xf32>
    %74 = arith.addf %72, %73 : vector<8x256xf32>
    %75 = vector.extract_strided_slice %74 {offsets = [0, 0], sizes = [8, 192], strides = [1, 1]} : vector<8x256xf32> to vector<8x192xf32>
    %76 = arith.negf %75 : vector<8x192xf32>
    %77 = math.exp %76 : vector<8x192xf32>
    %cst_16 = arith.constant 1.000000e+00 : f32
    %78 = vector.broadcast %cst_16 : f32 to vector<8x192xf32>
    %79 = arith.addf %78, %77 : vector<8x192xf32>
    %80 = arith.divf %78, %79 : vector<8x192xf32>
    %81 = vector.extract_strided_slice %80 {offsets = [0, 0], sizes = [8, 64], strides = [1, 1]} : vector<8x192xf32> to vector<8x64xf32>
    %82 = vector.extract_strided_slice %80 {offsets = [0, 64], sizes = [8, 64], strides = [1, 1]} : vector<8x192xf32> to vector<8x64xf32>
    %83 = vector.extract_strided_slice %80 {offsets = [0, 128], sizes = [8, 64], strides = [1, 1]} : vector<8x192xf32> to vector<8x64xf32>
    %84 = vector.extract_strided_slice %74 {offsets = [0, 192], sizes = [8, 64], strides = [1, 1]} : vector<8x256xf32> to vector<8x64xf32>
    %85 = math.tanh %84 : vector<8x64xf32>
    %86 = arith.mulf %82, %67 : vector<8x64xf32>
    %87 = arith.mulf %81, %85 : vector<8x64xf32>
    %88 = arith.addf %86, %87 : vector<8x64xf32>
    %89 = math.tanh %88 : vector<8x64xf32>
    %90 = arith.mulf %83, %89 : vector<8x64xf32>
    %91 = vector.extract_strided_slice %90 {offsets = [0, 0], sizes = [8, 32], strides = [1, 1]} : vector<8x64xf32> to vector<8x32xf32>
    %92 = vector.extract_strided_slice %90 {offsets = [0, 32], sizes = [8, 32], strides = [1, 1]} : vector<8x64xf32> to vector<8x32xf32>
    %93 = vector.extract_strided_slice %5 {offsets = [32, 0], sizes = [8, 256], strides = [1, 1]} : vector<64x256xf32> to vector<8x256xf32>
    %cst_17 = arith.constant dense<0.000000e+00> : vector<8x256xf32>
    %94 = tpu.matmul %90, %6, %cst_17 {dimension_numbers = #tpu.dot_dimension_numbers<[1], [0], [0], [1], [0, 0, 1, 1], [], []>} : vector<8x64xf32>, vector<64x256xf32>, vector<8x256xf32> -> vector<8x256xf32>
    %95 = arith.addf %93, %94 : vector<8x256xf32>
    %96 = vector.extract_strided_slice %95 {offsets = [0, 0], sizes = [8, 192], strides = [1, 1]} : vector<8x256xf32> to vector<8x192xf32>
    %97 = arith.negf %96 : vector<8x192xf32>
    %98 = math.exp %97 : vector<8x192xf32>
    %cst_18 = arith.constant 1.000000e+00 : f32
    %99 = vector.broadcast %cst_18 : f32 to vector<8x192xf32>
    %100 = arith.addf %99, %98 : vector<8x192xf32>
    %101 = arith.divf %99, %100 : vector<8x192xf32>
    %102 = vector.extract_strided_slice %101 {offsets = [0, 0], sizes = [8, 64], strides = [1, 1]} : vector<8x192xf32> to vector<8x64xf32>
    %103 = vector.extract_strided_slice %101 {offsets = [0, 64], sizes = [8, 64], strides = [1, 1]} : vector<8x192xf32> to vector<8x64xf32>
    %104 = vector.extract_strided_slice %101 {offsets = [0, 128], sizes = [8, 64], strides = [1, 1]} : vector<8x192xf32> to vector<8x64xf32>
    %105 = vector.extract_strided_slice %95 {offsets = [0, 192], sizes = [8, 64], strides = [1, 1]} : vector<8x256xf32> to vector<8x64xf32>
    %106 = math.tanh %105 : vector<8x64xf32>
    %107 = arith.mulf %103, %88 : vector<8x64xf32>
    %108 = arith.mulf %102, %106 : vector<8x64xf32>
    %109 = arith.addf %107, %108 : vector<8x64xf32>
    %110 = math.tanh %109 : vector<8x64xf32>
    %111 = arith.mulf %104, %110 : vector<8x64xf32>
    %112 = vector.extract_strided_slice %111 {offsets = [0, 0], sizes = [8, 32], strides = [1, 1]} : vector<8x64xf32> to vector<8x32xf32>
    %113 = vector.extract_strided_slice %111 {offsets = [0, 32], sizes = [8, 32], strides = [1, 1]} : vector<8x64xf32> to vector<8x32xf32>
    %114 = vector.extract_strided_slice %5 {offsets = [40, 0], sizes = [8, 256], strides = [1, 1]} : vector<64x256xf32> to vector<8x256xf32>
    %cst_19 = arith.constant dense<0.000000e+00> : vector<8x256xf32>
    %115 = tpu.matmul %111, %6, %cst_19 {dimension_numbers = #tpu.dot_dimension_numbers<[1], [0], [0], [1], [0, 0, 1, 1], [], []>} : vector<8x64xf32>, vector<64x256xf32>, vector<8x256xf32> -> vector<8x256xf32>
    %116 = arith.addf %114, %115 : vector<8x256xf32>
    %117 = vector.extract_strided_slice %116 {offsets = [0, 0], sizes = [8, 192], strides = [1, 1]} : vector<8x256xf32> to vector<8x192xf32>
    %118 = arith.negf %117 : vector<8x192xf32>
    %119 = math.exp %118 : vector<8x192xf32>
    %cst_20 = arith.constant 1.000000e+00 : f32
    %120 = vector.broadcast %cst_20 : f32 to vector<8x192xf32>
    %121 = arith.addf %120, %119 : vector<8x192xf32>
    %122 = arith.divf %120, %121 : vector<8x192xf32>
    %123 = vector.extract_strided_slice %122 {offsets = [0, 0], sizes = [8, 64], strides = [1, 1]} : vector<8x192xf32> to vector<8x64xf32>
    %124 = vector.extract_strided_slice %122 {offsets = [0, 64], sizes = [8, 64], strides = [1, 1]} : vector<8x192xf32> to vector<8x64xf32>
    %125 = vector.extract_strided_slice %122 {offsets = [0, 128], sizes = [8, 64], strides = [1, 1]} : vector<8x192xf32> to vector<8x64xf32>
    %126 = vector.extract_strided_slice %116 {offsets = [0, 192], sizes = [8, 64], strides = [1, 1]} : vector<8x256xf32> to vector<8x64xf32>
    %127 = math.tanh %126 : vector<8x64xf32>
    %128 = arith.mulf %124, %109 : vector<8x64xf32>
    %129 = arith.mulf %123, %127 : vector<8x64xf32>
    %130 = arith.addf %128, %129 : vector<8x64xf32>
    %131 = math.tanh %130 : vector<8x64xf32>
    %132 = arith.mulf %125, %131 : vector<8x64xf32>
    %133 = vector.extract_strided_slice %132 {offsets = [0, 0], sizes = [8, 32], strides = [1, 1]} : vector<8x64xf32> to vector<8x32xf32>
    %134 = vector.extract_strided_slice %132 {offsets = [0, 32], sizes = [8, 32], strides = [1, 1]} : vector<8x64xf32> to vector<8x32xf32>
    %135 = vector.extract_strided_slice %5 {offsets = [48, 0], sizes = [8, 256], strides = [1, 1]} : vector<64x256xf32> to vector<8x256xf32>
    %cst_21 = arith.constant dense<0.000000e+00> : vector<8x256xf32>
    %136 = tpu.matmul %132, %6, %cst_21 {dimension_numbers = #tpu.dot_dimension_numbers<[1], [0], [0], [1], [0, 0, 1, 1], [], []>} : vector<8x64xf32>, vector<64x256xf32>, vector<8x256xf32> -> vector<8x256xf32>
    %137 = arith.addf %135, %136 : vector<8x256xf32>
    %138 = vector.extract_strided_slice %137 {offsets = [0, 0], sizes = [8, 192], strides = [1, 1]} : vector<8x256xf32> to vector<8x192xf32>
    %139 = arith.negf %138 : vector<8x192xf32>
    %140 = math.exp %139 : vector<8x192xf32>
    %cst_22 = arith.constant 1.000000e+00 : f32
    %141 = vector.broadcast %cst_22 : f32 to vector<8x192xf32>
    %142 = arith.addf %141, %140 : vector<8x192xf32>
    %143 = arith.divf %141, %142 : vector<8x192xf32>
    %144 = vector.extract_strided_slice %143 {offsets = [0, 0], sizes = [8, 64], strides = [1, 1]} : vector<8x192xf32> to vector<8x64xf32>
    %145 = vector.extract_strided_slice %143 {offsets = [0, 64], sizes = [8, 64], strides = [1, 1]} : vector<8x192xf32> to vector<8x64xf32>
    %146 = vector.extract_strided_slice %143 {offsets = [0, 128], sizes = [8, 64], strides = [1, 1]} : vector<8x192xf32> to vector<8x64xf32>
    %147 = vector.extract_strided_slice %137 {offsets = [0, 192], sizes = [8, 64], strides = [1, 1]} : vector<8x256xf32> to vector<8x64xf32>
    %148 = math.tanh %147 : vector<8x64xf32>
    %149 = arith.mulf %145, %130 : vector<8x64xf32>
    %150 = arith.mulf %144, %148 : vector<8x64xf32>
    %151 = arith.addf %149, %150 : vector<8x64xf32>
    %152 = math.tanh %151 : vector<8x64xf32>
    %153 = arith.mulf %146, %152 : vector<8x64xf32>
    %154 = vector.extract_strided_slice %153 {offsets = [0, 0], sizes = [8, 32], strides = [1, 1]} : vector<8x64xf32> to vector<8x32xf32>
    %155 = vector.extract_strided_slice %153 {offsets = [0, 32], sizes = [8, 32], strides = [1, 1]} : vector<8x64xf32> to vector<8x32xf32>
    %156 = vector.extract_strided_slice %5 {offsets = [56, 0], sizes = [8, 256], strides = [1, 1]} : vector<64x256xf32> to vector<8x256xf32>
    %cst_23 = arith.constant dense<0.000000e+00> : vector<8x256xf32>
    %157 = tpu.matmul %153, %6, %cst_23 {dimension_numbers = #tpu.dot_dimension_numbers<[1], [0], [0], [1], [0, 0, 1, 1], [], []>} : vector<8x64xf32>, vector<64x256xf32>, vector<8x256xf32> -> vector<8x256xf32>
    %158 = arith.addf %156, %157 : vector<8x256xf32>
    %159 = vector.extract_strided_slice %158 {offsets = [0, 0], sizes = [8, 192], strides = [1, 1]} : vector<8x256xf32> to vector<8x192xf32>
    %160 = arith.negf %159 : vector<8x192xf32>
    %161 = math.exp %160 : vector<8x192xf32>
    %cst_24 = arith.constant 1.000000e+00 : f32
    %162 = vector.broadcast %cst_24 : f32 to vector<8x192xf32>
    %163 = arith.addf %162, %161 : vector<8x192xf32>
    %164 = arith.divf %162, %163 : vector<8x192xf32>
    %165 = vector.extract_strided_slice %164 {offsets = [0, 0], sizes = [8, 64], strides = [1, 1]} : vector<8x192xf32> to vector<8x64xf32>
    %166 = vector.extract_strided_slice %164 {offsets = [0, 64], sizes = [8, 64], strides = [1, 1]} : vector<8x192xf32> to vector<8x64xf32>
    %167 = vector.extract_strided_slice %164 {offsets = [0, 128], sizes = [8, 64], strides = [1, 1]} : vector<8x192xf32> to vector<8x64xf32>
    %168 = vector.extract_strided_slice %158 {offsets = [0, 192], sizes = [8, 64], strides = [1, 1]} : vector<8x256xf32> to vector<8x64xf32>
    %169 = math.tanh %168 : vector<8x64xf32>
    %170 = arith.mulf %166, %151 : vector<8x64xf32>
    %171 = arith.mulf %165, %169 : vector<8x64xf32>
    %172 = arith.addf %170, %171 : vector<8x64xf32>
    %173 = math.tanh %172 : vector<8x64xf32>
    %174 = arith.mulf %167, %173 : vector<8x64xf32>
    %175 = vector.extract_strided_slice %174 {offsets = [0, 0], sizes = [8, 32], strides = [1, 1]} : vector<8x64xf32> to vector<8x32xf32>
    %176 = vector.extract_strided_slice %174 {offsets = [0, 32], sizes = [8, 32], strides = [1, 1]} : vector<8x64xf32> to vector<8x32xf32>
    %177 = tpu.concatenate %28, %176, %49, %155, %70, %134, %91, %113, %112, %92, %133, %71, %154, %50, %175, %29 in 1 : vector<8x32xf32>, vector<8x32xf32>, vector<8x32xf32>, vector<8x32xf32>, vector<8x32xf32>, vector<8x32xf32>, vector<8x32xf32>, vector<8x32xf32>, vector<8x32xf32>, vector<8x32xf32>, vector<8x32xf32>, vector<8x32xf32>, vector<8x32xf32>, vector<8x32xf32>, vector<8x32xf32>, vector<8x32xf32> -> vector<8x512xf32>
    %c0_25 = arith.constant 0 : index
    %c0_26 = arith.constant 0 : index
    %178 = vector.load %arg4[%c0_25, %c0_26] : memref<8x512xf32, #tpu.memory_space<vmem>>, vector<8x512xf32>
    tpu.vector_store %arg4[%c0_25, %c0_26], %177 {strides = array<i32>} : memref<8x512xf32, #tpu.memory_space<vmem>>, vector<8x512xf32>,
    %c0_27 = arith.constant 0 : index
    %c0_28 = arith.constant 0 : index
    %179 = vector.load %arg5[%c0_27, %c0_28] : memref<8x64xf32, #tpu.memory_space<vmem>>, vector<8x64xf32>
    tpu.vector_store %arg5[%c0_27, %c0_28], %174 {strides = array<i32>} : memref<8x64xf32, #tpu.memory_space<vmem>>, vector<8x64xf32>,
    %c0_29 = arith.constant 0 : index
    %c0_30 = arith.constant 0 : index
    %180 = vector.load %arg6[%c0_29, %c0_30] : memref<8x64xf32, #tpu.memory_space<vmem>>, vector<8x64xf32>
    tpu.vector_store %arg6[%c0_29, %c0_30], %172 {strides = array<i32>} : memref<8x64xf32, #tpu.memory_space<vmem>>, vector<8x64xf32>,
    return
  }
}

</mosaic_0001>

<llo_original>
// kernel: sequence_encoder_forward.1
$region0: #{sequence_encoder_forward.1}
  #allocation0 [shape = 'u32[]', space=smem, size = 0x4, offset = 0x4, fixed_abs, tag = 'smem constant byte address 0x4 - core index']
  #allocation1 [shape = 'u32[144,128]{1,0:T(1,128)}', space=vmem, size = 0x12000, scoped, tag = 'internal scratch']
  %s0 = inlined_call_operand.vmem [shape: f32[64,64], index: 0, kind: input, shape index: {}]
  %s1 = inlined_call_operand.vmem [shape: f32[64,256], index: 1, kind: input, shape index: {}]
  %s2 = inlined_call_operand.vmem [shape: f32[64,256], index: 2, kind: input, shape index: {}]
  %s3 = inlined_call_operand.vmem [shape: f32[1,256], index: 3, kind: input, shape index: {}]
  %s4 = inlined_call_operand.vmem [shape: f32[8,512], index: 4, kind: output, shape index: {0}]
  %s5 = inlined_call_operand.vmem [shape: f32[8,64], index: 5, kind: output, shape index: {1}]
  %s6 = inlined_call_operand.vmem [shape: f32[8,64], index: 6, kind: output, shape index: {2}]
  %7 = xla_tuple %s4, %s5, %s6
  %s8 = sld [smem:[#allocation0]]
  $region42: #{sequence_encoder_forward.1} parent=0
    _
  %s10 = ssub.s32 1, %s8
  %s11 = scalar_select 0, %s10, %s8
  // Predicated region
  $region2: #{sequence_encoder_forward.1} parent=0 // pred_check
    _
  $region3: #{sequence_encoder_forward.1} parent=0 // pred_check_branch
    %13 = sbr.rel (0) target = $region5
  $region4: #{sequence_encoder_forward.1} parent=0 // pred_region
    _
  $region5: #{sequence_encoder_forward.1} parent=0 // pred_fallthru
    _
  // Predicated region
  $region6: #{sequence_encoder_forward.1} parent=0 // pred_check
    _
  $region7: #{sequence_encoder_forward.1} parent=0 // pred_check_branch
    %15 = sbr.rel (0) target = $region9
  $region8: #{sequence_encoder_forward.1} parent=0 // pred_region
    _
  $region9: #{sequence_encoder_forward.1} parent=0 // pred_fallthru
    _
  // Predicated region
  $region10: #{sequence_encoder_forward.1} parent=0 // pred_check
    _
  $region11: #{sequence_encoder_forward.1} parent=0 // pred_check_branch
    %17 = sbr.rel (0) target = $region13
  $region12: #{sequence_encoder_forward.1} parent=0 // pred_region
    _
  $region13: #{sequence_encoder_forward.1} parent=0 // pred_fallthru
    _
  // Predicated region
  $region14: #{sequence_encoder_forward.1} parent=0 // pred_check
    _
  $region15: #{sequence_encoder_forward.1} parent=0 // pred_check_branch
    %19 = sbr.rel (0) target = $region17
  $region16: #{sequence_encoder_forward.1} parent=0 // pred_region
    _
  $region17: #{sequence_encoder_forward.1} parent=0 // pred_fallthru
    _
  %v20 = vld [vmem:[%s0] sm:$0xff]
  %v21 = vld [vmem:[%s0 + $0x8] sm:$0xff]
  %v22 = vld [vmem:[%s0 + $0x10] sm:$0xff]
  %v23 = vld [vmem:[%s0 + $0x18] sm:$0xff]
  %v24 = vld [vmem:[%s0 + $0x20] sm:$0xff]
  %v25 = vld [vmem:[%s0 + $0x28] sm:$0xff]
  %v26 = vld [vmem:[%s0 + $0x30] sm:$0xff]
  %v27 = vld [vmem:[%s0 + $0x38] sm:$0xff]
  %v28 = vld [vmem:[%s1] sm:$0xff]
  %v29 = vld [vmem:[%s1 + $0x8] sm:$0xff]
  %v30 = vld [vmem:[%s1 + $0x10] sm:$0xff]
  %v31 = vld [vmem:[%s1 + $0x18] sm:$0xff]
  %v32 = vld [vmem:[%s1 + $0x20] sm:$0xff]
  %v33 = vld [vmem:[%s1 + $0x28] sm:$0xff]
  %v34 = vld [vmem:[%s1 + $0x30] sm:$0xff]
  %v35 = vld [vmem:[%s1 + $0x38] sm:$0xff]
  %v36 = vld [vmem:[%s1 + $0x40] sm:$0xff]
  %v37 = vld [vmem:[%s1 + $0x48] sm:$0xff]
  %v38 = vld [vmem:[%s1 + $0x50] sm:$0xff]
  %v39 = vld [vmem:[%s1 + $0x58] sm:$0xff]
  %v40 = vld [vmem:[%s1 + $0x60] sm:$0xff]
  %v41 = vld [vmem:[%s1 + $0x68] sm:$0xff]
  %v42 = vld [vmem:[%s1 + $0x70] sm:$0xff]
  %v43 = vld [vmem:[%s1 + $0x78] sm:$0xff]
  %v44 = vld [vmem:[%s3] sm:$0x3]
  %v46 = vlaneseq
  %v47 = vshrl.u32 %v46, 7
  %v48 = vsub.s32 0, %v47
  %v49 = vrot.slane %v44, %v48
  %v50 = vlaneseq
  %v51 = vshrl.u32 %v50, 7
  %v52 = vsub.s32 1, %v51
  %v53 = vrot.slane %v44, %v52
  %vm56 = vcmask 523264
  %v58 = vsel %vm56, %v20, 0
  %v61 = vsel %vm56, %v21, 0
  %v64 = vsel %vm56, %v22, 0
  %v67 = vsel %vm56, %v23, 0
  %v70 = vsel %vm56, %v24, 0
  %v73 = vsel %vm56, %v25, 0
  %v76 = vsel %vm56, %v26, 0
  %v79 = vsel %vm56, %v27, 0
  %81 = vmatprep.subr.mxu0 %v29
  %82 = vmatpush1.msra.mxu0 %v28
  %83 = vmatprep.subr.mxu0 %v31
  %84 = vmatpush1.msra.mxu0 %v30
  %85 = vmatprep.subr.mxu0 %v33
  %86 = vmatpush1.msra.mxu0 %v32
  %87 = vmatprep.subr.mxu0 %v35
  %88 = vmatpush1.msra.mxu0 %v34
  %89 = vmatprep.subr.mxu0 %v37
  %90 = vmatpush1.msra.mxu0 %v36
  %91 = vmatprep.subr.mxu0 %v39
  %92 = vmatpush1.msra.mxu0 %v38
  %93 = vmatprep.subr.mxu0 %v41
  %94 = vmatpush1.msra.mxu0 %v40
  %95 = vmatprep.subr.mxu0 %v43
  %96 = vmatpush1.msra.mxu0 %v42
  %97 = vmatprep.subr.mxu0 0.0
  %98 = vmatpush1.msra.mxu0 0.0
  %99 = vmatprep.subr.mxu0 0.0
  %100 = vmatpush1.msra.mxu0 0.0
  %101 = vmatprep.subr.mxu0 0.0
  %102 = vmatpush1.msra.mxu0 0.0
  %103 = vmatprep.subr.mxu0 0.0
  %104 = vmatpush1.msra.mxu0 0.0
  %105 = vmatprep.subr.mxu0 0.0
  %106 = vmatpush1.msra.mxu0 0.0
  %107 = vmatprep.subr.mxu0 0.0
  %108 = vmatpush1.msra.mxu0 0.0
  %109 = vmatprep.subr.mxu0 0.0
  %110 = vmatpush1.msra.mxu0 0.0
  %111 = vmatprep.subr.mxu0 0.0
  %112 = vmatpush1.msra.mxu0 0.0
  %113 = vmatprep.subr.mxu0 0.0
  %114 = vmatpush1.msra.mxu0 0.0
  %115 = vmatprep.subr.mxu0 0.0
  %116 = vmatpush1.msra.mxu0 0.0
  %117 = vmatprep.subr.mxu0 0.0
  %118 = vmatpush1.msra.mxu0 0.0
  %119 = vmatprep.subr.mxu0 0.0
  %120 = vmatpush1.msra.mxu0 0.0
  %121 = vmatprep.subr.mxu0 0.0
  %122 = vmatpush1.msra.mxu0 0.0
  %123 = vmatprep.subr.mxu0 0.0
  %124 = vmatpush1.msra.mxu0 0.0
  %125 = vmatprep.subr.mxu0 0.0
  %126 = vmatpush1.msra.mxu0 0.0
  %127 = vmatprep.subr.mxu0 0.0
  %128 = vmatpush1.msra.mxu0 0.0
  %129 = vmatprep.subr.mxu0 0.0
  %130 = vmatpush1.msra.mxu0 0.0
  %131 = vmatprep.subr.mxu0 0.0
  %132 = vmatpush1.msra.mxu0 0.0
  %133 = vmatprep.subr.mxu0 0.0
  %134 = vmatpush1.msra.mxu0 0.0
  %135 = vmatprep.subr.mxu0 0.0
  %136 = vmatpush1.msra.mxu0 0.0
  %137 = vmatprep.subr.mxu0 0.0
  %138 = vmatpush1.msra.mxu0 0.0
  %139 = vmatprep.subr.mxu0 0.0
  %140 = vmatpush1.msra.mxu0 0.0
  %141 = vmatprep.subr.mxu0 0.0
  %142 = vmatpush1.msra.mxu0 0.0
  %143 = vmatprep.subr.mxu0 0.0
  %144 = vmatpush1.msra.mxu0 0.0
  %145 = vmatprep.mubr.f32.mxu0 0.0
  %146 = vmatmul.mubr.f32.gmra.mrb[0].mxu0 %v58
  %v147 = vpop.f32.mrb[0].mxu0
  %v148 = vadd.f32 %v49, %v147
  %v149 = vpop.f32.mrb[0].mxu0
  %v150 = vadd.f32 %v53, %v149
  %151 = vmatprep.mubr.f32.mxu0 0.0
  %152 = vmatmul.mubr.f32.gmra.mrb[0].mxu0 %v61
  %v153 = vpop.f32.mrb[0].mxu0
  %v154 = vadd.f32 %v49, %v153
  %v155 = vpop.f32.mrb[0].mxu0
  %v156 = vadd.f32 %v53, %v155
  %157 = vmatprep.mubr.f32.mxu0 0.0
  %158 = vmatmul.mubr.f32.gmra.mrb[0].mxu0 %v64
  %v159 = vpop.f32.mrb[0].mxu0
  %v160 = vadd.f32 %v49, %v159
  %v161 = vpop.f32.mrb[0].mxu0
  %v162 = vadd.f32 %v53, %v161
  %163 = vmatprep.mubr.f32.mxu0 0.0
  %164 = vmatmul.mubr.f32.gmra.mrb[0].mxu0 %v67
  %v165 = vpop.f32.mrb[0].mxu0
  %v166 = vadd.f32 %v49, %v165
  %v167 = vpop.f32.mrb[0].mxu0
  %v168 = vadd.f32 %v53, %v167
  %169 = vmatprep.mubr.f32.mxu0 0.0
  %170 = vmatmul.mubr.f32.gmra.mrb[0].mxu0 %v70
  %v171 = vpop.f32.mrb[0].mxu0
  %v172 = vadd.f32 %v49, %v171
  %v173 = vpop.f32.mrb[0].mxu0
  %v174 = vadd.f32 %v53, %v173
  %175 = vmatprep.mubr.f32.mxu0 0.0
  %176 = vmatmul.mubr.f32.gmra.mrb[0].mxu0 %v73
  %v177 = vpop.f32.mrb[0].mxu0
  %v178 = vadd.f32 %v49, %v177
  %v179 = vpop.f32.mrb[0].mxu0
  %v180 = vadd.f32 %v53, %v179
  %181 = vmatprep.mubr.f32.mxu0 0.0
  %182 = vmatmul.mubr.f32.gmra.mrb[0].mxu0 %v76
  %v183 = vpop.f32.mrb[0].mxu0
  %v184 = vadd.f32 %v49, %v183
  %v185 = vpop.f32.mrb[0].mxu0
  %v186 = vadd.f32 %v53, %v185
  %187 = vmatprep.mubr.f32.mxu0 0.0
  %188 = vmatmul.mubr.f32.gmra.mrb[0].mxu0 %v79
  %v189 = vpop.f32.mrb[0].mxu0
  %v190 = vadd.f32 %v49, %v189
  %v191 = vpop.f32.mrb[0].mxu0
  %v192 = vadd.f32 %v53, %v191
  %193 = vdwg.mxu0
  %v194 = vld [vmem:[%s2] sm:$0xff]
  %v195 = vld [vmem:[%s2 + $0x8] sm:$0xff]
  %v196 = vld [vmem:[%s2 + $0x10] sm:$0xff]
  %v197 = vld [vmem:[%s2 + $0x18] sm:$0xff]
  %v198 = vld [vmem:[%s2 + $0x20] sm:$0xff]
  %v199 = vld [vmem:[%s2 + $0x28] sm:$0xff]
  %v200 = vld [vmem:[%s2 + $0x30] sm:$0xff]
  %v201 = vld [vmem:[%s2 + $0x38] sm:$0xff]
  %v202 = vld [vmem:[%s2 + $0x40] sm:$0xff]
  %v203 = vld [vmem:[%s2 + $0x48] sm:$0xff]
  %v204 = vld [vmem:[%s2 + $0x50] sm:$0xff]
  %v205 = vld [vmem:[%s2 + $0x58] sm:$0xff]
  %v206 = vld [vmem:[%s2 + $0x60] sm:$0xff]
  %v207 = vld [vmem:[%s2 + $0x68] sm:$0xff]
  %v208 = vld [vmem:[%s2 + $0x70] sm:$0xff]
  %v209 = vld [vmem:[%s2 + $0x78] sm:$0xff]
  %v211 = vsel %vm56, 0.0, 0
  %213 = vmatprep.subr.mxu0 %v195
  %214 = vmatpush1.msra.mxu0 %v194
  %215 = vmatprep.subr.mxu0 %v197
  %216 = vmatpush1.msra.mxu0 %v196
  %217 = vmatprep.subr.mxu0 %v199
  %218 = vmatpush1.msra.mxu0 %v198
  %219 = vmatprep.subr.mxu0 %v201
  %220 = vmatpush1.msra.mxu0 %v200
  %221 = vmatprep.subr.mxu0 %v203
  %222 = vmatpush1.msra.mxu0 %v202
  %223 = vmatprep.subr.mxu0 %v205
  %224 = vmatpush1.msra.mxu0 %v204
  %225 = vmatprep.subr.mxu0 %v207
  %226 = vmatpush1.msra.mxu0 %v206
  %227 = vmatprep.subr.mxu0 %v209
  %228 = vmatpush1.msra.mxu0 %v208
  %229 = vmatprep.subr.mxu0 0.0
  %230 = vmatpush1.msra.mxu0 0.0
  %231 = vmatprep.subr.mxu0 0.0
  %232 = vmatpush1.msra.mxu0 0.0
  %233 = vmatprep.subr.mxu0 0.0
  %234 = vmatpush1.msra.mxu0 0.0
  %235 = vmatprep.subr.mxu0 0.0
  %236 = vmatpush1.msra.mxu0 0.0
  %237 = vmatprep.subr.mxu0 0.0
  %238 = vmatpush1.msra.mxu0 0.0
  %239 = vmatprep.subr.mxu0 0.0
  %240 = vmatpush1.msra.mxu0 0.0
  %241 = vmatprep.subr.mxu0 0.0
  %242 = vmatpush1.msra.mxu0 0.0
  %243 = vmatprep.subr.mxu0 0.0
  %244 = vmatpush1.msra.mxu0 0.0
  %245 = vmatprep.subr.mxu0 0.0
  %246 = vmatpush1.msra.mxu0 0.0
  %247 = vmatprep.subr.mxu0 0.0
  %248 = vmatpush1.msra.mxu0 0.0
  %249 = vmatprep.subr.mxu0 0.0
  %250 = vmatpush1.msra.mxu0 0.0
  %251 = vmatprep.subr.mxu0 0.0
  %252 = vmatpush1.msra.mxu0 0.0
  %253 = vmatprep.subr.mxu0 0.0
  %254 = vmatpush1.msra.mxu0 0.0
  %255 = vmatprep.subr.mxu0 0.0
  %256 = vmatpush1.msra.mxu0 0.0
  %257 = vmatprep.subr.mxu0 0.0
  %258 = vmatpush1.msra.mxu0 0.0
  %259 = vmatprep.subr.mxu0 0.0
  %260 = vmatpush1.msra.mxu0 0.0
  %261 = vmatprep.subr.mxu0 0.0
  %262 = vmatpush1.msra.mxu0 0.0
  %263 = vmatprep.subr.mxu0 0.0
  %264 = vmatpush1.msra.mxu0 0.0
  %265 = vmatprep.subr.mxu0 0.0
  %266 = vmatpush1.msra.mxu0 0.0
  %267 = vmatprep.subr.mxu0 0.0
  %268 = vmatpush1.msra.mxu0 0.0
  %269 = vmatprep.subr.mxu0 0.0
  %270 = vmatpush1.msra.mxu0 0.0
  %271 = vmatprep.subr.mxu0 0.0
  %272 = vmatpush1.msra.mxu0 0.0
  %273 = vmatprep.subr.mxu0 0.0
  %274 = vmatpush1.msra.mxu0 0.0
  %275 = vmatprep.subr.mxu0 0.0
  %276 = vmatpush1.msra.mxu0 0.0
  %277 = vmatprep.mubr.f32.mxu0 0.0
  %278 = vmatmul.mubr.f32.gmra.mrb[0].mxu0 %v211
  %v279 = vpop.f32.mrb[0].mxu0
  %v280 = vadd.f32 0.0, %v279
  %v281 = vpop.f32.mrb[0].mxu0
  %v282 = vadd.f32 0.0, %v281
  %283 = vdwg.mxu0
  %v284 = vadd.f32 %v148, %v280
  %v285 = vadd.f32 %v150, %v282
  %v286 = vxor.u32 %v284, 2147483648
  %v287 = vxor.u32 %v285, 2147483648
  %v288 = vmul.f32 %v286, 1.442695
  %v289 = vpow.pop %v288
  %v290 = vmul.f32 %v287, 1.442695
  %v291 = vpow.pop %v290
  %v292 = vadd.f32 %v289, 1.0
  %v293 = vadd.f32 %v291, 1.0
  %v294 = vrcp.pop %v292
  %v295 = vmul.f32 1.0, %v294
  %v296 = vrcp.pop %v293
  %v297 = vmul.f32 1.0, %v296
  %v298 = vtanh.pop %v285
  %v299 = vmul.f32 %v295, 0.0
  %301 = vrot.lane.b32.xlu0 %v298, 64
  %v302 = vpop.permute.xlu0 %301
  %v304 = vmul.f32 %v295, %v302
  %306 = vrot.lane.b32.xlu0 %v304, 64
  %v307 = vpop.permute.xlu0 %306
  %v309 = vadd.f32 %v299, %v307
  %v310 = vtanh.pop %v309
  %312 = vrot.lane.b32.xlu0 %v310, 64
  %v313 = vpop.permute.xlu0 %312
  %v315 = vmul.f32 %v297, %v313
  %v317 = vsel %vm56, %v315, 0
  %319 = vmatprep.subr.mxu0 %v195
  %320 = vmatpush1.msra.mxu0 %v194
  %321 = vmatprep.subr.mxu0 %v197
  %322 = vmatpush1.msra.mxu0 %v196
  %323 = vmatprep.subr.mxu0 %v199
  %324 = vmatpush1.msra.mxu0 %v198
  %325 = vmatprep.subr.mxu0 %v201
  %326 = vmatpush1.msra.mxu0 %v200
  %327 = vmatprep.subr.mxu0 %v203
  %328 = vmatpush1.msra.mxu0 %v202
  %329 = vmatprep.subr.mxu0 %v205
  %330 = vmatpush1.msra.mxu0 %v204
  %331 = vmatprep.subr.mxu0 %v207
  %332 = vmatpush1.msra.mxu0 %v206
  %333 = vmatprep.subr.mxu0 %v209
  %334 = vmatpush1.msra.mxu0 %v208
  %335 = vmatprep.subr.mxu0 0.0
  %336 = vmatpush1.msra.mxu0 0.0
  %337 = vmatprep.subr.mxu0 0.0
  %338 = vmatpush1.msra.mxu0 0.0
  %339 = vmatprep.subr.mxu0 0.0
  %340 = vmatpush1.msra.mxu0 0.0
  %341 = vmatprep.subr.mxu0 0.0
  %342 = vmatpush1.msra.mxu0 0.0
  %343 = vmatprep.subr.mxu0 0.0
  %344 = vmatpush1.msra.mxu0 0.0
  %345 = vmatprep.subr.mxu0 0.0
  %346 = vmatpush1.msra.mxu0 0.0
  %347 = vmatprep.subr.mxu0 0.0
  %348 = vmatpush1.msra.mxu0 0.0
  %349 = vmatprep.subr.mxu0 0.0
  %350 = vmatpush1.msra.mxu0 0.0
  %351 = vmatprep.subr.mxu0 0.0
  %352 = vmatpush1.msra.mxu0 0.0
  %353 = vmatprep.subr.mxu0 0.0
  %354 = vmatpush1.msra.mxu0 0.0
  %355 = vmatprep.subr.mxu0 0.0
  %356 = vmatpush1.msra.mxu0 0.0
  %357 = vmatprep.subr.mxu0 0.0
  %358 = vmatpush1.msra.mxu0 0.0
  %359 = vmatprep.subr.mxu0 0.0
  %360 = vmatpush1.msra.mxu0 0.0
  %361 = vmatprep.subr.mxu0 0.0
  %362 = vmatpush1.msra.mxu0 0.0
  %363 = vmatprep.subr.mxu0 0.0
  %364 = vmatpush1.msra.mxu0 0.0
  %365 = vmatprep.subr.mxu0 0.0
  %366 = vmatpush1.msra.mxu0 0.0
  %367 = vmatprep.subr.mxu0 0.0
  %368 = vmatpush1.msra.mxu0 0.0
  %369 = vmatprep.subr.mxu0 0.0
  %370 = vmatpush1.msra.mxu0 0.0
  %371 = vmatprep.subr.mxu0 0.0
  %372 = vmatpush1.msra.mxu0 0.0
  %373 = vmatprep.subr.mxu0 0.0
  %374 = vmatpush1.msra.mxu0 0.0
  %375 = vmatprep.subr.mxu0 0.0
  %376 = vmatpush1.msra.mxu0 0.0
  %377 = vmatprep.subr.mxu0 0.0
  %378 = vmatpush1.msra.mxu0 0.0
  %379 = vmatprep.subr.mxu0 0.0
  %380 = vmatpush1.msra.mxu0 0.0
  %381 = vmatprep.subr.mxu0 0.0
  %382 = vmatpush1.msra.mxu0 0.0
  %383 = vmatprep.mubr.f32.mxu0 0.0
  %384 = vmatmul.mubr.f32.gmra.mrb[0].mxu0 %v317
  %v385 = vpop.f32.mrb[0].mxu0
  %v386 = vadd.f32 0.0, %v385
  %v387 = vpop.f32.mrb[0].mxu0
  %v388 = vadd.f32 0.0, %v387
  %389 = vdwg.mxu0
  %v390 = vadd.f32 %v154, %v386
  %v391 = vadd.f32 %v156, %v388
  %v392 = vxor.u32 %v390, 2147483648
  %v393 = vxor.u32 %v391, 2147483648
  %v394 = vmul.f32 %v392, 1.442695
  %v395 = vpow.pop %v394
  %v396 = vmul.f32 %v393, 1.442695
  %v397 = vpow.pop %v396
  %v398 = vadd.f32 %v395, 1.0
  %v399 = vadd.f32 %v397, 1.0
  %v400 = vrcp.pop %v398
  %v401 = vmul.f32 1.0, %v400
  %v402 = vrcp.pop %v399
  %v403 = vmul.f32 1.0, %v402
  %v404 = vtanh.pop %v391
  %v405 = vmul.f32 %v401, %v309
  %407 = vrot.lane.b32.xlu0 %v404, 64
  %v408 = vpop.permute.xlu0 %407
  %v410 = vmul.f32 %v401, %v408
  %412 = vrot.lane.b32.xlu0 %v410, 64
  %v413 = vpop.permute.xlu0 %412
  %v415 = vadd.f32 %v405, %v413
  %v416 = vtanh.pop %v415
  %418 = vrot.lane.b32.xlu0 %v416, 64
  %v419 = vpop.permute.xlu0 %418
  %v421 = vmul.f32 %v403, %v419
  %v423 = vsel %vm56, %v421, 0
  %425 = vmatprep.subr.mxu0 %v195
  %426 = vmatpush1.msra.mxu0 %v194
  %427 = vmatprep.subr.mxu0 %v197
  %428 = vmatpush1.msra.mxu0 %v196
  %429 = vmatprep.subr.mxu0 %v199
  %430 = vmatpush1.msra.mxu0 %v198
  %431 = vmatprep.subr.mxu0 %v201
  %432 = vmatpush1.msra.mxu0 %v200
  %433 = vmatprep.subr.mxu0 %v203
  %434 = vmatpush1.msra.mxu0 %v202
  %435 = vmatprep.subr.mxu0 %v205
  %436 = vmatpush1.msra.mxu0 %v204
  %437 = vmatprep.subr.mxu0 %v207
  %438 = vmatpush1.msra.mxu0 %v206
  %439 = vmatprep.subr.mxu0 %v209
  %440 = vmatpush1.msra.mxu0 %v208
  %441 = vmatprep.subr.mxu0 0.0
  %442 = vmatpush1.msra.mxu0 0.0
  %443 = vmatprep.subr.mxu0 0.0
  %444 = vmatpush1.msra.mxu0 0.0
  %445 = vmatprep.subr.mxu0 0.0
  %446 = vmatpush1.msra.mxu0 0.0
  %447 = vmatprep.subr.mxu0 0.0
  %448 = vmatpush1.msra.mxu0 0.0
  %449 = vmatprep.subr.mxu0 0.0
  %450 = vmatpush1.msra.mxu0 0.0
  %451 = vmatprep.subr.mxu0 0.0
  %452 = vmatpush1.msra.mxu0 0.0
  %453 = vmatprep.subr.mxu0 0.0
  %454 = vmatpush1.msra.mxu0 0.0
  %455 = vmatprep.subr.mxu0 0.0
  %456 = vmatpush1.msra.mxu0 0.0
  %457 = vmatprep.subr.mxu0 0.0
  %458 = vmatpush1.msra.mxu0 0.0
  %459 = vmatprep.subr.mxu0 0.0
  %460 = vmatpush1.msra.mxu0 0.0
  %461 = vmatprep.subr.mxu0 0.0
  %462 = vmatpush1.msra.mxu0 0.0
  %463 = vmatprep.subr.mxu0 0.0
  %464 = vmatpush1.msra.mxu0 0.0
  %465 = vmatprep.subr.mxu0 0.0
  %466 = vmatpush1.msra.mxu0 0.0
  %467 = vmatprep.subr.mxu0 0.0
  %468 = vmatpush1.msra.mxu0 0.0
  %469 = vmatprep.subr.mxu0 0.0
  %470 = vmatpush1.msra.mxu0 0.0
  %471 = vmatprep.subr.mxu0 0.0
  %472 = vmatpush1.msra.mxu0 0.0
  %473 = vmatprep.subr.mxu0 0.0
  %474 = vmatpush1.msra.mxu0 0.0
  %475 = vmatprep.subr.mxu0 0.0
  %476 = vmatpush1.msra.mxu0 0.0
  %477 = vmatprep.subr.mxu0 0.0
  %478 = vmatpush1.msra.mxu0 0.0
  %479 = vmatprep.subr.mxu0 0.0
  %480 = vmatpush1.msra.mxu0 0.0
  %481 = vmatprep.subr.mxu0 0.0
  %482 = vmatpush1.msra.mxu0 0.0
  %483 = vmatprep.subr.mxu0 0.0
  %484 = vmatpush1.msra.mxu0 0.0
  %485 = vmatprep.subr.mxu0 0.0
  %486 = vmatpush1.msra.mxu0 0.0
  %487 = vmatprep.subr.mxu0 0.0
  %488 = vmatpush1.msra.mxu0 0.0
  %489 = vmatprep.mubr.f32.mxu0 0.0
  %490 = vmatmul.mubr.f32.gmra.mrb[0].mxu0 %v423
  %v491 = vpop.f32.mrb[0].mxu0
  %v492 = vadd.f32 0.0, %v491
  %v493 = vpop.f32.mrb[0].mxu0
  %v494 = vadd.f32 0.0, %v493
  %495 = vdwg.mxu0
  %v496 = vadd.f32 %v160, %v492
  %v497 = vadd.f32 %v162, %v494
  %v498 = vxor.u32 %v496, 2147483648
  %v499 = vxor.u32 %v497, 2147483648
  %v500 = vmul.f32 %v498, 1.442695
  %v501 = vpow.pop %v500
  %v502 = vmul.f32 %v499, 1.442695
  %v503 = vpow.pop %v502
  %v504 = vadd.f32 %v501, 1.0
  %v505 = vadd.f32 %v503, 1.0
  %v506 = vrcp.pop %v504
  %v507 = vmul.f32 1.0, %v506
  %v508 = vrcp.pop %v505
  %v509 = vmul.f32 1.0, %v508
  %v510 = vtanh.pop %v497
  %v511 = vmul.f32 %v507, %v415
  %513 = vrot.lane.b32.xlu0 %v510, 64
  %v514 = vpop.permute.xlu0 %513
  %v516 = vmul.f32 %v507, %v514
  %518 = vrot.lane.b32.xlu0 %v516, 64
  %v519 = vpop.permute.xlu0 %518
  %v521 = vadd.f32 %v511, %v519
  %v522 = vtanh.pop %v521
  %524 = vrot.lane.b32.xlu0 %v522, 64
  %v525 = vpop.permute.xlu0 %524
  %v527 = vmul.f32 %v509, %v525
  %v529 = vsel %vm56, %v527, 0
  %531 = vmatprep.subr.mxu0 %v195
  %532 = vmatpush1.msra.mxu0 %v194
  %533 = vmatprep.subr.mxu0 %v197
  %534 = vmatpush1.msra.mxu0 %v196
  %535 = vmatprep.subr.mxu0 %v199
  %536 = vmatpush1.msra.mxu0 %v198
  %537 = vmatprep.subr.mxu0 %v201
  %538 = vmatpush1.msra.mxu0 %v200
  %539 = vmatprep.subr.mxu0 %v203
  %540 = vmatpush1.msra.mxu0 %v202
  %541 = vmatprep.subr.mxu0 %v205
  %542 = vmatpush1.msra.mxu0 %v204
  %543 = vmatprep.subr.mxu0 %v207
  %544 = vmatpush1.msra.mxu0 %v206
  %545 = vmatprep.subr.mxu0 %v209
  %546 = vmatpush1.msra.mxu0 %v208
  %547 = vmatprep.subr.mxu0 0.0
  %548 = vmatpush1.msra.mxu0 0.0
  %549 = vmatprep.subr.mxu0 0.0
  %550 = vmatpush1.msra.mxu0 0.0
  %551 = vmatprep.subr.mxu0 0.0
  %552 = vmatpush1.msra.mxu0 0.0
  %553 = vmatprep.subr.mxu0 0.0
  %554 = vmatpush1.msra.mxu0 0.0
  %555 = vmatprep.subr.mxu0 0.0
  %556 = vmatpush1.msra.mxu0 0.0
  %557 = vmatprep.subr.mxu0 0.0
  %558 = vmatpush1.msra.mxu0 0.0
  %559 = vmatprep.subr.mxu0 0.0
  %560 = vmatpush1.msra.mxu0 0.0
  %561 = vmatprep.subr.mxu0 0.0
  %562 = vmatpush1.msra.mxu0 0.0
  %563 = vmatprep.subr.mxu0 0.0
  %564 = vmatpush1.msra.mxu0 0.0
  %565 = vmatprep.subr.mxu0 0.0
  %566 = vmatpush1.msra.mxu0 0.0
  %567 = vmatprep.subr.mxu0 0.0
  %568 = vmatpush1.msra.mxu0 0.0
  %569 = vmatprep.subr.mxu0 0.0
  %570 = vmatpush1.msra.mxu0 0.0
  %571 = vmatprep.subr.mxu0 0.0
  %572 = vmatpush1.msra.mxu0 0.0
  %573 = vmatprep.subr.mxu0 0.0
  %574 = vmatpush1.msra.mxu0 0.0
  %575 = vmatprep.subr.mxu0 0.0
  %576 = vmatpush1.msra.mxu0 0.0
  %577 = vmatprep.subr.mxu0 0.0
  %578 = vmatpush1.msra.mxu0 0.0
  %579 = vmatprep.subr.mxu0 0.0
  %580 = vmatpush1.msra.mxu0 0.0
  %581 = vmatprep.subr.mxu0 0.0
  %582 = vmatpush1.msra.mxu0 0.0
  %583 = vmatprep.subr.mxu0 0.0
  %584 = vmatpush1.msra.mxu0 0.0
  %585 = vmatprep.subr.mxu0 0.0
  %586 = vmatpush1.msra.mxu0 0.0
  %587 = vmatprep.subr.mxu0 0.0
  %588 = vmatpush1.msra.mxu0 0.0
  %589 = vmatprep.subr.mxu0 0.0
  %590 = vmatpush1.msra.mxu0 0.0
  %591 = vmatprep.subr.mxu0 0.0
  %592 = vmatpush1.msra.mxu0 0.0
  %593 = vmatprep.subr.mxu0 0.0
  %594 = vmatpush1.msra.mxu0 0.0
  %595 = vmatprep.mubr.f32.mxu0 0.0
  %596 = vmatmul.mubr.f32.gmra.mrb[0].mxu0 %v529
  %v597 = vpop.f32.mrb[0].mxu0
  %v598 = vadd.f32 0.0, %v597
  %v599 = vpop.f32.mrb[0].mxu0
  %v600 = vadd.f32 0.0, %v599
  %601 = vdwg.mxu0
  %v602 = vadd.f32 %v166, %v598
  %v603 = vadd.f32 %v168, %v600
  %v604 = vxor.u32 %v602, 2147483648
  %v605 = vxor.u32 %v603, 2147483648
  %v606 = vmul.f32 %v604, 1.442695
  %v607 = vpow.pop %v606
  %v608 = vmul.f32 %v605, 1.442695
  %v609 = vpow.pop %v608
  %v610 = vadd.f32 %v607, 1.0
  %v611 = vadd.f32 %v609, 1.0
  %v612 = vrcp.pop %v610
  %v613 = vmul.f32 1.0, %v612
  %v614 = vrcp.pop %v611
  %v615 = vmul.f32 1.0, %v614
  %v616 = vtanh.pop %v603
  %v617 = vmul.f32 %v613, %v521
  %619 = vrot.lane.b32.xlu0 %v616, 64
  %v620 = vpop.permute.xlu0 %619
  %v622 = vmul.f32 %v613, %v620
  %624 = vrot.lane.b32.xlu0 %v622, 64
  %v625 = vpop.permute.xlu0 %624
  %v627 = vadd.f32 %v617, %v625
  %v628 = vtanh.pop %v627
  %630 = vrot.lane.b32.xlu0 %v628, 64
  %v631 = vpop.permute.xlu0 %630
  %v633 = vmul.f32 %v615, %v631
  %v635 = vsel %vm56, %v633, 0
  %637 = vmatprep.subr.mxu0 %v195
  %638 = vmatpush1.msra.mxu0 %v194
  %639 = vmatprep.subr.mxu0 %v197
  %640 = vmatpush1.msra.mxu0 %v196
  %641 = vmatprep.subr.mxu0 %v199
  %642 = vmatpush1.msra.mxu0 %v198
  %643 = vmatprep.subr.mxu0 %v201
  %644 = vmatpush1.msra.mxu0 %v200
  %645 = vmatprep.subr.mxu0 %v203
  %646 = vmatpush1.msra.mxu0 %v202
  %647 = vmatprep.subr.mxu0 %v205
  %648 = vmatpush1.msra.mxu0 %v204
  %649 = vmatprep.subr.mxu0 %v207
  %650 = vmatpush1.msra.mxu0 %v206
  %651 = vmatprep.subr.mxu0 %v209
  %652 = vmatpush1.msra.mxu0 %v208
  %653 = vmatprep.subr.mxu0 0.0
  %654 = vmatpush1.msra.mxu0 0.0
  %655 = vmatprep.subr.mxu0 0.0
  %656 = vmatpush1.msra.mxu0 0.0
  %657 = vmatprep.subr.mxu0 0.0
  %658 = vmatpush1.msra.mxu0 0.0
  %659 = vmatprep.subr.mxu0 0.0
  %660 = vmatpush1.msra.mxu0 0.0
  %661 = vmatprep.subr.mxu0 0.0
  %662 = vmatpush1.msra.mxu0 0.0
  %663 = vmatprep.subr.mxu0 0.0
  %664 = vmatpush1.msra.mxu0 0.0
  %665 = vmatprep.subr.mxu0 0.0
  %666 = vmatpush1.msra.mxu0 0.0
  %667 = vmatprep.subr.mxu0 0.0
  %668 = vmatpush1.msra.mxu0 0.0
  %669 = vmatprep.subr.mxu0 0.0
  %670 = vmatpush1.msra.mxu0 0.0
  %671 = vmatprep.subr.mxu0 0.0
  %672 = vmatpush1.msra.mxu0 0.0
  %673 = vmatprep.subr.mxu0 0.0
  %674 = vmatpush1.msra.mxu0 0.0
  %675 = vmatprep.subr.mxu0 0.0
  %676 = vmatpush1.msra.mxu0 0.0
  %677 = vmatprep.subr.mxu0 0.0
  %678 = vmatpush1.msra.mxu0 0.0
  %679 = vmatprep.subr.mxu0 0.0
  %680 = vmatpush1.msra.mxu0 0.0
  %681 = vmatprep.subr.mxu0 0.0
  %682 = vmatpush1.msra.mxu0 0.0
  %683 = vmatprep.subr.mxu0 0.0
  %684 = vmatpush1.msra.mxu0 0.0
  %685 = vmatprep.subr.mxu0 0.0
  %686 = vmatpush1.msra.mxu0 0.0
  %687 = vmatprep.subr.mxu0 0.0
  %688 = vmatpush1.msra.mxu0 0.0
  %689 = vmatprep.subr.mxu0 0.0
  %690 = vmatpush1.msra.mxu0 0.0
  %691 = vmatprep.subr.mxu0 0.0
  %692 = vmatpush1.msra.mxu0 0.0
  %693 = vmatprep.subr.mxu0 0.0
  %694 = vmatpush1.msra.mxu0 0.0
  %695 = vmatprep.subr.mxu0 0.0
  %696 = vmatpush1.msra.mxu0 0.0
  %697 = vmatprep.subr.mxu0 0.0
  %698 = vmatpush1.msra.mxu0 0.0
  %699 = vmatprep.subr.mxu0 0.0
  %700 = vmatpush1.msra.mxu0 0.0
  %701 = vmatprep.mubr.f32.mxu0 0.0
  %702 = vmatmul.mubr.f32.gmra.mrb[0].mxu0 %v635
  %v703 = vpop.f32.mrb[0].mxu0
  %v704 = vadd.f32 0.0, %v703
  %v705 = vpop.f32.mrb[0].mxu0
  %v706 = vadd.f32 0.0, %v705
  %707 = vdwg.mxu0
  %v708 = vadd.f32 %v172, %v704
  %v709 = vadd.f32 %v174, %v706
  %v710 = vxor.u32 %v708, 2147483648
  %v711 = vxor.u32 %v709, 2147483648
  %v712 = vmul.f32 %v710, 1.442695
  %v713 = vpow.pop %v712
  %v714 = vmul.f32 %v711, 1.442695
  %v715 = vpow.pop %v714
  %v716 = vadd.f32 %v713, 1.0
  %v717 = vadd.f32 %v715, 1.0
  %v718 = vrcp.pop %v716
  %v719 = vmul.f32 1.0, %v718
  %v720 = vrcp.pop %v717
  %v721 = vmul.f32 1.0, %v720
  %v722 = vtanh.pop %v709
  %v723 = vmul.f32 %v719, %v627
  %725 = vrot.lane.b32.xlu0 %v722, 64
  %v726 = vpop.permute.xlu0 %725
  %v728 = vmul.f32 %v719, %v726
  %730 = vrot.lane.b32.xlu0 %v728, 64
  %v731 = vpop.permute.xlu0 %730
  %v733 = vadd.f32 %v723, %v731
  %v734 = vtanh.pop %v733
  %736 = vrot.lane.b32.xlu0 %v734, 64
  %v737 = vpop.permute.xlu0 %736
  %v739 = vmul.f32 %v721, %v737
  %v741 = vsel %vm56, %v739, 0
  %743 = vmatprep.subr.mxu0 %v195
  %744 = vmatpush1.msra.mxu0 %v194
  %745 = vmatprep.subr.mxu0 %v197
  %746 = vmatpush1.msra.mxu0 %v196
  %747 = vmatprep.subr.mxu0 %v199
  %748 = vmatpush1.msra.mxu0 %v198
  %749 = vmatprep.subr.mxu0 %v201
  %750 = vmatpush1.msra.mxu0 %v200
  %751 = vmatprep.subr.mxu0 %v203
  %752 = vmatpush1.msra.mxu0 %v202
  %753 = vmatprep.subr.mxu0 %v205
  %754 = vmatpush1.msra.mxu0 %v204
  %755 = vmatprep.subr.mxu0 %v207
  %756 = vmatpush1.msra.mxu0 %v206
  %757 = vmatprep.subr.mxu0 %v209
  %758 = vmatpush1.msra.mxu0 %v208
  %759 = vmatprep.subr.mxu0 0.0
  %760 = vmatpush1.msra.mxu0 0.0
  %761 = vmatprep.subr.mxu0 0.0
  %762 = vmatpush1.msra.mxu0 0.0
  %763 = vmatprep.subr.mxu0 0.0
  %764 = vmatpush1.msra.mxu0 0.0
  %765 = vmatprep.subr.mxu0 0.0
  %766 = vmatpush1.msra.mxu0 0.0
  %767 = vmatprep.subr.mxu0 0.0
  %768 = vmatpush1.msra.mxu0 0.0
  %769 = vmatprep.subr.mxu0 0.0
  %770 = vmatpush1.msra.mxu0 0.0
  %771 = vmatprep.subr.mxu0 0.0
  %772 = vmatpush1.msra.mxu0 0.0
  %773 = vmatprep.subr.mxu0 0.0
  %774 = vmatpush1.msra.mxu0 0.0
  %775 = vmatprep.subr.mxu0 0.0
  %776 = vmatpush1.msra.mxu0 0.0
  %777 = vmatprep.subr.mxu0 0.0
  %778 = vmatpush1.msra.mxu0 0.0
  %779 = vmatprep.subr.mxu0 0.0
  %780 = vmatpush1.msra.mxu0 0.0
  %781 = vmatprep.subr.mxu0 0.0
  %782 = vmatpush1.msra.mxu0 0.0
  %783 = vmatprep.subr.mxu0 0.0
  %784 = vmatpush1.msra.mxu0 0.0
  %785 = vmatprep.subr.mxu0 0.0
  %786 = vmatpush1.msra.mxu0 0.0
  %787 = vmatprep.subr.mxu0 0.0
  %788 = vmatpush1.msra.mxu0 0.0
  %789 = vmatprep.subr.mxu0 0.0
  %790 = vmatpush1.msra.mxu0 0.0
  %791 = vmatprep.subr.mxu0 0.0
  %792 = vmatpush1.msra.mxu0 0.0
  %793 = vmatprep.subr.mxu0 0.0
  %794 = vmatpush1.msra.mxu0 0.0
  %795 = vmatprep.subr.mxu0 0.0
  %796 = vmatpush1.msra.mxu0 0.0
  %797 = vmatprep.subr.mxu0 0.0
  %798 = vmatpush1.msra.mxu0 0.0
  %799 = vmatprep.subr.mxu0 0.0
  %800 = vmatpush1.msra.mxu0 0.0
  %801 = vmatprep.subr.mxu0 0.0
  %802 = vmatpush1.msra.mxu0 0.0
  %803 = vmatprep.subr.mxu0 0.0
  %804 = vmatpush1.msra.mxu0 0.0
  %805 = vmatprep.subr.mxu0 0.0
  %806 = vmatpush1.msra.mxu0 0.0
  %807 = vmatprep.mubr.f32.mxu0 0.0
  %808 = vmatmul.mubr.f32.gmra.mrb[0].mxu0 %v741
  %v809 = vpop.f32.mrb[0].mxu0
  %v810 = vadd.f32 0.0, %v809
  %v811 = vpop.f32.mrb[0].mxu0
  %v812 = vadd.f32 0.0, %v811
  %813 = vdwg.mxu0
  %v814 = vadd.f32 %v178, %v810
  %v815 = vadd.f32 %v180, %v812
  %v816 = vxor.u32 %v814, 2147483648
  %v817 = vxor.u32 %v815, 2147483648
  %v818 = vmul.f32 %v816, 1.442695
  %v819 = vpow.pop %v818
  %v820 = vmul.f32 %v817, 1.442695
  %v821 = vpow.pop %v820
  %v822 = vadd.f32 %v819, 1.0
  %v823 = vadd.f32 %v821, 1.0
  %v824 = vrcp.pop %v822
  %v825 = vmul.f32 1.0, %v824
  %v826 = vrcp.pop %v823
  %v827 = vmul.f32 1.0, %v826
  %v828 = vtanh.pop %v815
  %v829 = vmul.f32 %v825, %v733
  %831 = vrot.lane.b32.xlu0 %v828, 64
  %v832 = vpop.permute.xlu0 %831
  %v834 = vmul.f32 %v825, %v832
  %836 = vrot.lane.b32.xlu0 %v834, 64
  %v837 = vpop.permute.xlu0 %836
  %v839 = vadd.f32 %v829, %v837
  %v840 = vtanh.pop %v839
  %842 = vrot.lane.b32.xlu0 %v840, 64
  %v843 = vpop.permute.xlu0 %842
  %v845 = vmul.f32 %v827, %v843
  %v847 = vsel %vm56, %v845, 0
  %849 = vmatprep.subr.mxu0 %v195
  %850 = vmatpush1.msra.mxu0 %v194
  %851 = vmatprep.subr.mxu0 %v197
  %852 = vmatpush1.msra.mxu0 %v196
  %853 = vmatprep.subr.mxu0 %v199
  %854 = vmatpush1.msra.mxu0 %v198
  %855 = vmatprep.subr.mxu0 %v201
  %856 = vmatpush1.msra.mxu0 %v200
  %857 = vmatprep.subr.mxu0 %v203
  %858 = vmatpush1.msra.mxu0 %v202
  %859 = vmatprep.subr.mxu0 %v205
  %860 = vmatpush1.msra.mxu0 %v204
  %861 = vmatprep.subr.mxu0 %v207
  %862 = vmatpush1.msra.mxu0 %v206
  %863 = vmatprep.subr.mxu0 %v209
  %864 = vmatpush1.msra.mxu0 %v208
  %865 = vmatprep.subr.mxu0 0.0
  %866 = vmatpush1.msra.mxu0 0.0
  %867 = vmatprep.subr.mxu0 0.0
  %868 = vmatpush1.msra.mxu0 0.0
  %869 = vmatprep.subr.mxu0 0.0
  %870 = vmatpush1.msra.mxu0 0.0
  %871 = vmatprep.subr.mxu0 0.0
  %872 = vmatpush1.msra.mxu0 0.0
  %873 = vmatprep.subr.mxu0 0.0
  %874 = vmatpush1.msra.mxu0 0.0
  %875 = vmatprep.subr.mxu0 0.0
  %876 = vmatpush1.msra.mxu0 0.0
  %877 = vmatprep.subr.mxu0 0.0
  %878 = vmatpush1.msra.mxu0 0.0
  %879 = vmatprep.subr.mxu0 0.0
  %880 = vmatpush1.msra.mxu0 0.0
  %881 = vmatprep.subr.mxu0 0.0
  %882 = vmatpush1.msra.mxu0 0.0
  %883 = vmatprep.subr.mxu0 0.0
  %884 = vmatpush1.msra.mxu0 0.0
  %885 = vmatprep.subr.mxu0 0.0
  %886 = vmatpush1.msra.mxu0 0.0
  %887 = vmatprep.subr.mxu0 0.0
  %888 = vmatpush1.msra.mxu0 0.0
  %889 = vmatprep.subr.mxu0 0.0
  %890 = vmatpush1.msra.mxu0 0.0
  %891 = vmatprep.subr.mxu0 0.0
  %892 = vmatpush1.msra.mxu0 0.0
  %893 = vmatprep.subr.mxu0 0.0
  %894 = vmatpush1.msra.mxu0 0.0
  %895 = vmatprep.subr.mxu0 0.0
  %896 = vmatpush1.msra.mxu0 0.0
  %897 = vmatprep.subr.mxu0 0.0
  %898 = vmatpush1.msra.mxu0 0.0
  %899 = vmatprep.subr.mxu0 0.0
  %900 = vmatpush1.msra.mxu0 0.0
  %901 = vmatprep.subr.mxu0 0.0
  %902 = vmatpush1.msra.mxu0 0.0
  %903 = vmatprep.subr.mxu0 0.0
  %904 = vmatpush1.msra.mxu0 0.0
  %905 = vmatprep.subr.mxu0 0.0
  %906 = vmatpush1.msra.mxu0 0.0
  %907 = vmatprep.subr.mxu0 0.0
  %908 = vmatpush1.msra.mxu0 0.0
  %909 = vmatprep.subr.mxu0 0.0
  %910 = vmatpush1.msra.mxu0 0.0
  %911 = vmatprep.subr.mxu0 0.0
  %912 = vmatpush1.msra.mxu0 0.0
  %913 = vmatprep.mubr.f32.mxu0 0.0
  %914 = vmatmul.mubr.f32.gmra.mrb[0].mxu0 %v847
  %v915 = vpop.f32.mrb[0].mxu0
  %v916 = vadd.f32 0.0, %v915
  %v917 = vpop.f32.mrb[0].mxu0
  %v918 = vadd.f32 0.0, %v917
  %919 = vdwg.mxu0
  %v920 = vadd.f32 %v184, %v916
  %v921 = vadd.f32 %v186, %v918
  %v922 = vxor.u32 %v920, 2147483648
  %v923 = vxor.u32 %v921, 2147483648
  %v924 = vmul.f32 %v922, 1.442695
  %v925 = vpow.pop %v924
  %v926 = vmul.f32 %v923, 1.442695
  %v927 = vpow.pop %v926
  %v928 = vadd.f32 %v925, 1.0
  %v929 = vadd.f32 %v927, 1.0
  %v930 = vrcp.pop %v928
  %v931 = vmul.f32 1.0, %v930
  %v932 = vrcp.pop %v929
  %v933 = vmul.f32 1.0, %v932
  %v934 = vtanh.pop %v921
  %v935 = vmul.f32 %v931, %v839
  %937 = vrot.lane.b32.xlu0 %v934, 64
  %v938 = vpop.permute.xlu0 %937
  %v940 = vmul.f32 %v931, %v938
  %942 = vrot.lane.b32.xlu0 %v940, 64
  %v943 = vpop.permute.xlu0 %942
  %v945 = vadd.f32 %v935, %v943
  %v946 = vtanh.pop %v945
  %948 = vrot.lane.b32.xlu0 %v946, 64
  %v949 = vpop.permute.xlu0 %948
  %v951 = vmul.f32 %v933, %v949
  %v953 = vsel %vm56, %v951, 0
  %955 = vmatprep.subr.mxu0 %v195
  %956 = vmatpush1.msra.mxu0 %v194
  %957 = vmatprep.subr.mxu0 %v197
  %958 = vmatpush1.msra.mxu0 %v196
  %959 = vmatprep.subr.mxu0 %v199
  %960 = vmatpush1.msra.mxu0 %v198
  %961 = vmatprep.subr.mxu0 %v201
  %962 = vmatpush1.msra.mxu0 %v200
  %963 = vmatprep.subr.mxu0 %v203
  %964 = vmatpush1.msra.mxu0 %v202
  %965 = vmatprep.subr.mxu0 %v205
  %966 = vmatpush1.msra.mxu0 %v204
  %967 = vmatprep.subr.mxu0 %v207
  %968 = vmatpush1.msra.mxu0 %v206
  %969 = vmatprep.subr.mxu0 %v209
  %970 = vmatpush1.msra.mxu0 %v208
  %971 = vmatprep.subr.mxu0 0.0
  %972 = vmatpush1.msra.mxu0 0.0
  %973 = vmatprep.subr.mxu0 0.0
  %974 = vmatpush1.msra.mxu0 0.0
  %975 = vmatprep.subr.mxu0 0.0
  %976 = vmatpush1.msra.mxu0 0.0
  %977 = vmatprep.subr.mxu0 0.0
  %978 = vmatpush1.msra.mxu0 0.0
  %979 = vmatprep.subr.mxu0 0.0
  %980 = vmatpush1.msra.mxu0 0.0
  %981 = vmatprep.subr.mxu0 0.0
  %982 = vmatpush1.msra.mxu0 0.0
  %983 = vmatprep.subr.mxu0 0.0
  %984 = vmatpush1.msra.mxu0 0.0
  %985 = vmatprep.subr.mxu0 0.0
  %986 = vmatpush1.msra.mxu0 0.0
  %987 = vmatprep.subr.mxu0 0.0
  %988 = vmatpush1.msra.mxu0 0.0
  %989 = vmatprep.subr.mxu0 0.0
  %990 = vmatpush1.msra.mxu0 0.0
  %991 = vmatprep.subr.mxu0 0.0
  %992 = vmatpush1.msra.mxu0 0.0
  %993 = vmatprep.subr.mxu0 0.0
  %994 = vmatpush1.msra.mxu0 0.0
  %995 = vmatprep.subr.mxu0 0.0
  %996 = vmatpush1.msra.mxu0 0.0
  %997 = vmatprep.subr.mxu0 0.0
  %998 = vmatpush1.msra.mxu0 0.0
  %999 = vmatprep.subr.mxu0 0.0
  %1000 = vmatpush1.msra.mxu0 0.0
  %1001 = vmatprep.subr.mxu0 0.0
  %1002 = vmatpush1.msra.mxu0 0.0
  %1003 = vmatprep.subr.mxu0 0.0
  %1004 = vmatpush1.msra.mxu0 0.0
  %1005 = vmatprep.subr.mxu0 0.0
  %1006 = vmatpush1.msra.mxu0 0.0
  %1007 = vmatprep.subr.mxu0 0.0
  %1008 = vmatpush1.msra.mxu0 0.0
  %1009 = vmatprep.subr.mxu0 0.0
  %1010 = vmatpush1.msra.mxu0 0.0
  %1011 = vmatprep.subr.mxu0 0.0
  %1012 = vmatpush1.msra.mxu0 0.0
  %1013 = vmatprep.subr.mxu0 0.0
  %1014 = vmatpush1.msra.mxu0 0.0
  %1015 = vmatprep.subr.mxu0 0.0
  %1016 = vmatpush1.msra.mxu0 0.0
  %1017 = vmatprep.subr.mxu0 0.0
  %1018 = vmatpush1.msra.mxu0 0.0
  %1019 = vmatprep.mubr.f32.mxu0 0.0
  %1020 = vmatmul.mubr.f32.gmra.mrb[0].mxu0 %v953
  %v1021 = vpop.f32.mrb[0].mxu0
  %v1022 = vadd.f32 0.0, %v1021
  %v1023 = vpop.f32.mrb[0].mxu0
  %v1024 = vadd.f32 0.0, %v1023
  %1025 = vdwg.mxu0
  %v1026 = vadd.f32 %v190, %v1022
  %v1027 = vadd.f32 %v192, %v1024
  %v1028 = vxor.u32 %v1026, 2147483648
  %v1029 = vxor.u32 %v1027, 2147483648
  %v1030 = vmul.f32 %v1028, 1.442695
  %v1031 = vpow.pop %v1030
  %v1032 = vmul.f32 %v1029, 1.442695
  %v1033 = vpow.pop %v1032
  %v1034 = vadd.f32 %v1031, 1.0
  %v1035 = vadd.f32 %v1033, 1.0
  %v1036 = vrcp.pop %v1034
  %v1037 = vmul.f32 1.0, %v1036
  %v1038 = vrcp.pop %v1035
  %v1039 = vmul.f32 1.0, %v1038
  %v1040 = vtanh.pop %v1027
  %v1041 = vmul.f32 %v1037, %v945
  %1043 = vrot.lane.b32.xlu0 %v1040, 64
  %v1044 = vpop.permute.xlu0 %1043
  %v1046 = vmul.f32 %v1037, %v1044
  %1048 = vrot.lane.b32.xlu0 %v1046, 64
  %v1049 = vpop.permute.xlu0 %1048
  %v1051 = vadd.f32 %v1041, %v1049
  %v1052 = vtanh.pop %v1051
  %1054 = vrot.lane.b32.xlu0 %v1052, 64
  %v1055 = vpop.permute.xlu0 %1054
  %v1057 = vmul.f32 %v1039, %v1055
  %1058 = vrot.lane.b32.xlu0 %v421, 64
  %v1059 = vpop.permute.xlu0 %1058
  %1061 = vrot.lane.b32.xlu0 %v951, 64
  %v1062 = vpop.permute.xlu0 %1061
  %1064 = vrot.lane.b32.xlu0 %v633, 64
  %v1065 = vpop.permute.xlu0 %1064
  %1067 = vrot.lane.b32.xlu0 %v739, 64
  %v1068 = vpop.permute.xlu0 %1067
  %1070 = vrot.lane.b32.xlu0 %v845, 64
  %v1071 = vpop.permute.xlu0 %1070
  %1073 = vrot.lane.b32.xlu0 %v527, 64
  %v1074 = vpop.permute.xlu0 %1073
  %1077 = vrot.lane.b32.xlu0 %v1057, 64
  %v1078 = vpop.permute.xlu0 %1077
  %1080 = vrot.lane.b32.xlu0 %v315, 64
  %v1081 = vpop.permute.xlu0 %1080
  %vm1083 = vcmask 261120
  %v1084 = vsel %vm1083, %v315, %v1057
  %v1085 = vsel %vm56, %v1084, %v1059
  %vm1086 = vcmask 785408
  %v1087 = vsel %vm1086, %v1085, %v1062
  %v1088 = vsel %vm1083, %v527, %v845
  %v1089 = vsel %vm56, %v1088, %v1065
  %v1090 = vsel %vm1086, %v1089, %v1068
  %v1091 = vsel %vm1083, %v739, %v633
  %v1092 = vsel %vm56, %v1091, %v1071
  %v1093 = vsel %vm1086, %v1092, %v1074
  %v1094 = vsel %vm1083, %v951, %v421
  %v1095 = vsel %vm56, %v1094, %v1078
  %v1096 = vsel %vm1086, %v1095, %v1081
  %1097 = vst [vmem:[%s4] sm:$0xff] %v1087
  %1098 = vst [vmem:[%s4 + $0x8] sm:$0xff] %v1090
  %1099 = vst [vmem:[%s4 + $0x10] sm:$0xff] %v1093
  %1100 = vst [vmem:[%s4 + $0x18] sm:$0xff] %v1096
  %1101 = vst.msk [vmem:[%s5] sm:$0xff] %vm56, %v1057
  %1103 = vrot.lane.b32.xlu0 %v1051, 64
  %v1104 = vpop.permute.xlu0 %1103
  %1106 = vst.msk [vmem:[%s6] sm:$0xff] %vm56, %v1104
  // Predicated region
  $region18: #{sequence_encoder_forward.1} parent=0 // pred_check
    _
  $region19: #{sequence_encoder_forward.1} parent=0 // pred_check_branch
    %1108 = sbr.rel (0) target = $region21
  $region20: #{sequence_encoder_forward.1} parent=0 // pred_region
    _
  $region21: #{sequence_encoder_forward.1} parent=0 // pred_fallthru
    _
  // Predicated region
  $region22: #{sequence_encoder_forward.1} parent=0 // pred_check
    _
  $region23: #{sequence_encoder_forward.1} parent=0 // pred_check_branch
    %1110 = sbr.rel (0) target = $region25
  $region24: #{sequence_encoder_forward.1} parent=0 // pred_region
    _
  $region25: #{sequence_encoder_forward.1} parent=0 // pred_fallthru
    _
  // Predicated region
  $region26: #{sequence_encoder_forward.1} parent=0 // pred_check
    _
  $region27: #{sequence_encoder_forward.1} parent=0 // pred_check_branch
    %1112 = sbr.rel (0) target = $region29
  $region28: #{sequence_encoder_forward.1} parent=0 // pred_region
    _
  $region29: #{sequence_encoder_forward.1} parent=0 // pred_fallthru
    _
  // Predicated region
  $region30: #{sequence_encoder_forward.1} parent=0 // pred_check
    _
  $region31: #{sequence_encoder_forward.1} parent=0 // pred_check_branch
    %1114 = sbr.rel (0) target = $region33
  $region32: #{sequence_encoder_forward.1} parent=0 // pred_region
    _
  $region33: #{sequence_encoder_forward.1} parent=0 // pred_fallthru
    _
  // Predicated region
  $region34: #{sequence_encoder_forward.1} parent=0 // pred_check
    _
  $region35: #{sequence_encoder_forward.1} parent=0 // pred_check_branch
    %1116 = sbr.rel (0) target = $region37
  $region36: #{sequence_encoder_forward.1} parent=0 // pred_region
    _
  $region37: #{sequence_encoder_forward.1} parent=0 // pred_fallthru
    _
  // Predicated region
  $region38: #{sequence_encoder_forward.1} parent=0 // pred_check
    _
  $region39: #{sequence_encoder_forward.1} parent=0 // pred_check_branch
    %1118 = sbr.rel (0) target = $region41
  $region40: #{sequence_encoder_forward.1} parent=0 // pred_region
    _
  $region41: #{sequence_encoder_forward.1} parent=0 // pred_fallthru
    _

</llo_original>
